<compile_context>
chip_gen: v6e
topology: v6e:2x2x1
jax: 0.10.0
libtpu: 0.0.40
codegen_flags: <defaults>
</compile_context>

<pallas_src>
import math

import jax
import jax.numpy as jnp
from jax.experimental import pallas as pl
from jax.experimental.pallas import tpu as pltpu


def _smooth_matrix(sigma, n):
    """Dense 1-D smoothing operator with 'dct2' (symmetric) boundary.

    sigma : (B, C) Gaussian std-dev in voxels.
    Returns (B, C, n, n) float32; rows sum to 1 (identity as sigma -> 0), so
    applying it preserves constants exactly like
    `spatial.smooth(..., bound='dct2', padding='same')` does.
    """
    B, C = sigma.shape
    t = jnp.arange(-(n - 1), n)                                # (2n-1,) taps
    sig = jnp.maximum(sigma, 1e-3)[..., None]                  # (B, C, 1)
    w = jnp.exp(-0.5 * (t.astype(jnp.float32) / sig) ** 2)     # (B, C, 2n-1)
    w = w / jnp.sum(w, axis=-1, keepdims=True)
    i = jnp.arange(n)[:, None]                                 # (n, 1)
    j = i + t[None, :]                                         # source index
    period = 2 * n
    m = jnp.mod(j, period)
    src = jnp.where(m < n, m, period - 1 - m)                  # dct2 reflect
    rows = jnp.broadcast_to(i, (n, 2 * n - 1))
    upd = jnp.broadcast_to(w[:, :, None, :], (B, C, n, 2 * n - 1))
    smat = jnp.zeros((B, C, n, n), jnp.float32)
    # scatter-add of the reflected taps (replaces the O(n^3) one_hot einsum)
    return smat.at[:, :, rows, src].add(upd)


def hyper_random_gaussian_mixture(
        x, key, *, nb_classes, nb_channels=1,
        means_exp=0.0, means_scale=10.0,
        scales_exp=1.0, scales_scale=5.0,
        fwhm_exp=3.0, fwhm_scale=5.0,
        background_zero=False):
    if not jnp.issubdtype(x.dtype, jnp.floating):
        # TODO(synk): integer label maps (masked per-voxel assignment branch
        # of RandomGaussianMixture) — one-hot encode in glue if ever needed.
        raise NotImplementedError("only floating-point responsibilities")
    x = x.astype(jnp.float32)
    B, Kin, H, W = x.shape
    K, C = int(nb_classes), int(nb_channels)

    # ---- implicit background class handling (same semantics as torch) ----
    if Kin == K:
        resp = x
    else:                                   # implicit: x has K-1 channels
        bg = 1.0 - jnp.sum(x, axis=1, keepdims=True)   # unclamped, like torch
        resp = jnp.concatenate([bg, x], axis=1)

    # ---- per-batch hyper-parameter sampling (glue; mean/std moment-match
    #      approximates nitorch's _get_dist wrappers) ----
    k_mean, k_scale, k_fwhm, k_noise = jax.random.split(key, 4)
    means = means_exp + means_scale * jax.random.normal(
        k_mean, (B, C, K), jnp.float32)
    alpha = (scales_exp / scales_scale) ** 2
    rate = scales_exp / (scales_scale ** 2)
    scales = jax.random.gamma(k_scale, alpha, (B, C, K), jnp.float32) / rate
    scales = jnp.maximum(scales, 0.0)                      # clamp_min_(0)
    sig2 = math.log1p((fwhm_scale / fwhm_exp) ** 2)
    mu = math.log(fwhm_exp) - 0.5 * sig2
    fwhm = jnp.exp(mu + math.sqrt(sig2) *
                   jax.random.normal(k_fwhm, (B, C), jnp.float32))
    if background_zero:
        means = means.at[:, :, 0].set(0.0)
        scales = scales.at[:, :, 0].set(0.1)

    sigma = fwhm / math.sqrt(8.0 * math.log(2.0))          # fwhm -> std
    # bf16 MXU inputs; rows sum to 1, so mean fields pass through unchanged.
    S_h = _smooth_matrix(sigma, H).astype(jnp.bfloat16)                  # (B,C,H,H)
    S_wT = jnp.swapaxes(_smooth_matrix(sigma, W), -1, -2).astype(jnp.bfloat16)  # (B,C,W,W)

    # i.i.d. unit noise, pre-laid-out as (H, K*W) per (b, c) so the H-direction
    # smoothing of all K classes is a single MXU matmul with N = K*W.
    eps = jax.random.normal(
        k_noise, (B, C, H, K * W), jnp.float32).astype(jnp.bfloat16)

    means_flat = means.reshape(-1)     # (B*C*K,) f32 -> SMEM scalar prefetch
    scales_flat = scales.reshape(-1)   # (B*C*K,) f32 -> SMEM scalar prefetch

    def kernel(mean_sm, scale_sm, resp_ref, eps_ref, sh_ref, swt_ref,
               out_ref, z1_ref):
        b = pl.program_id(0)
        c = pl.program_id(1)
        base = (b * pl.num_programs(1) + c) * K
        sh = sh_ref[0, 0]              # (H, H)  bf16
        swt = swt_ref[0, 0]            # (W, W)  bf16 (pre-transposed)
        # 1) H-direction smoothing of all K classes at once: (H,H) @ (H, K*W)
        z1_ref[...] = jnp.dot(
            sh, eps_ref[0, 0],
            preferred_element_type=jnp.float32).astype(jnp.bfloat16)
        # 2) W-direction smoothing per class (static, lane-aligned column
        #    slices) + class-weighted reduction, accumulated into out_ref so
        #    no large accumulator stays live across the unrolled loop.
        for k in range(K):             # K is small & static -> unrolled
            zk = jnp.dot(z1_ref[:, k * W:(k + 1) * W], swt,
                         preferred_element_type=jnp.float32)   # (H, W) f32
            m = mean_sm[base + k]      # scalar reads from SMEM
            s = scale_sm[base + k]
            term = resp_ref[0, k] * (m + s * zk)               # addcmul_
            if k == 0:
                out_ref[0, 0] = term
            else:
                out_ref[0, 0] = out_ref[0, 0] + term

    grid_spec = pltpu.PrefetchScalarGridSpec(
        num_scalar_prefetch=2,
        grid=(B, C),
        in_specs=[
            pl.BlockSpec((1, K, H, W), lambda b, c, m, s: (b, 0, 0, 0)),
            pl.BlockSpec((1, 1, H, K * W), lambda b, c, m, s: (b, c, 0, 0)),
            pl.BlockSpec((1, 1, H, H), lambda b, c, m, s: (b, c, 0, 0)),
            pl.BlockSpec((1, 1, W, W), lambda b, c, m, s: (b, c, 0, 0)),
        ],
        out_specs=pl.BlockSpec((1, 1, H, W), lambda b, c, m, s: (b, c, 0, 0)),
        scratch_shapes=[pltpu.VMEM((H, K * W), jnp.bfloat16)],
    )

    # Explicit VMEM budget: double-buffered in/out blocks + scratch + margin,
    # clamped to [32 MiB, 64 MiB] (v5e scoped default is only 16 MiB; v7x
    # physical VMEM is 64 MiB).
    block_bytes = (K * H * W * 4            # resp block (f32)
                   + H * K * W * 2          # eps block (bf16)
                   + H * H * 2 + W * W * 2  # smoothing matrices (bf16)
                   + H * W * 4)             # output block (f32)
    vmem_limit = int(min(64 * 1024 * 1024,
                         max(2 * block_bytes + H * K * W * 2 + (2 << 20),
                             32 * 1024 * 1024)))

    out = pl.pallas_call(
        kernel,
        out_shape=jax.ShapeDtypeStruct((B, C, H, W), jnp.float32),
        grid_spec=grid_spec,
        compiler_params=pltpu.CompilerParams(
            dimension_semantics=("parallel", "parallel"),
            vmem_limit_bytes=vmem_limit),
    )(means_flat, scales_flat, resp, eps, S_h, S_wT)
    return out


if __name__ == "__main__":
    key = jax.random.PRNGKey(0)
    B, K, C, H, W = 2, 5, 4, 16, 128
    k_x, k_hyper = jax.random.split(key)
    # soft class responsibilities (probabilities summing to 1 over K)
    logits = jax.random.normal(k_x, (B, K, H, W), jnp.float32)
    x = jax.nn.softmax(logits, axis=1)

    out = hyper_random_gaussian_mixture(
        x, k_hyper, nb_classes=K, nb_channels=C)
    out = jax.block_until_ready(out)

    assert out.shape == (B, C, H, W), out.shape
    assert out.dtype == jnp.float32
    assert bool(jnp.all(jnp.isfinite(out)))
    print("KERNEL_OK")
</pallas_src>

<mosaic_0001>
module attributes {stable_mosaic.version = 11 : i64} {
  func.func @kernel(%arg0: i32, %arg1: i32, %arg2: memref<40xf32, #tpu.memory_space<smem>>, %arg3: memref<40xf32, #tpu.memory_space<smem>>, %arg4: memref<1x5x16x128xf32, #tpu.memory_space<vmem>>, %arg5: memref<1x1x16x640xbf16, #tpu.memory_space<vmem>>, %arg6: memref<1x1x16x16xbf16, #tpu.memory_space<vmem>>, %arg7: memref<1x1x128x128xbf16, #tpu.memory_space<vmem>>, %arg8: memref<1x1x16x128xf32, #tpu.memory_space<vmem>>, %arg9: memref<16x640xbf16, #tpu.memory_space<vmem>>) attributes {dimension_semantics = [#tpu.dimension_semantics<parallel>, #tpu.dimension_semantics<parallel>], iteration_bounds = array<i64: 2, 4>, scalar_prefetch = 2 : i64, scratch_operands = 1 : i64, tpu.core_type = #tpu.core_type<tc>, window_params = [{transform_indices = @transform_0, window_bounds = array<i64: 1, 5, 16, 128>}, {transform_indices = @transform_1, window_bounds = array<i64: 1, 1, 16, 640>}, {transform_indices = @transform_2, window_bounds = array<i64: 1, 1, 16, 16>}, {transform_indices = @transform_3, window_bounds = array<i64: 1, 1, 128, 128>}, {transform_indices = @transform_4, window_bounds = array<i64: 1, 1, 16, 128>}]} {
    %c4_i32 = arith.constant 4 : i32
    %0 = arith.muli %arg0, %c4_i32 : i32
    %1 = arith.addi %0, %arg1 : i32
    %c5_i32 = arith.constant 5 : i32
    %2 = arith.muli %1, %c5_i32 : i32
    %c0 = arith.constant 0 : index
    %c0_0 = arith.constant 0 : index
    %c0_1 = arith.constant 0 : index
    %c0_2 = arith.constant 0 : index
    %3 = vector.load %arg6[%c0, %c0_0, %c0_1, %c0_2] : memref<1x1x16x16xbf16, #tpu.memory_space<vmem>>, vector<1x1x16x16xbf16>
    %4 = vector.shape_cast %3 : vector<1x1x16x16xbf16> to vector<16x16xbf16>
    %c0_3 = arith.constant 0 : index
    %c0_4 = arith.constant 0 : index
    %c0_5 = arith.constant 0 : index
    %c0_6 = arith.constant 0 : index
    %5 = vector.load %arg7[%c0_3, %c0_4, %c0_5, %c0_6] : memref<1x1x128x128xbf16, #tpu.memory_space<vmem>>, vector<1x1x128x128xbf16>
    %6 = vector.shape_cast %5 : vector<1x1x128x128xbf16> to vector<128x128xbf16>
    %c0_7 = arith.constant 0 : index
    %c0_8 = arith.constant 0 : index
    %c0_9 = arith.constant 0 : index
    %c0_10 = arith.constant 0 : index
    %7 = vector.load %arg5[%c0_7, %c0_8, %c0_9, %c0_10] : memref<1x1x16x640xbf16, #tpu.memory_space<vmem>>, vector<1x1x16x640xbf16>
    %8 = vector.shape_cast %7 : vector<1x1x16x640xbf16> to vector<16x640xbf16>
    %cst = arith.constant dense<0.000000e+00> : vector<16x640xf32>
    %9 = tpu.matmul %4, %8, %cst {dimension_numbers = #tpu.dot_dimension_numbers<[1], [0], [0], [1], [0, 0, 1, 1], [], []>} : vector<16x16xbf16>, vector<16x640xbf16>, vector<16x640xf32> -> vector<16x640xf32>
    %10 = arith.truncf %9 : vector<16x640xf32> to vector<16x640xbf16>
    %c0_11 = arith.constant 0 : index
    %c0_12 = arith.constant 0 : index
    %11 = vector.load %arg9[%c0_11, %c0_12] : memref<16x640xbf16, #tpu.memory_space<vmem>>, vector<16x640xbf16>
    tpu.vector_store %arg9[%c0_11, %c0_12], %10 {strides = array<i32>} : memref<16x640xbf16, #tpu.memory_space<vmem>>, vector<16x640xbf16>,
    %c0_13 = arith.constant 0 : index
    %c0_14 = arith.constant 0 : index
    %12 = vector.load %arg9[%c0_13, %c0_14] : memref<16x640xbf16, #tpu.memory_space<vmem>>, vector<16x128xbf16>
    %cst_15 = arith.constant dense<0.000000e+00> : vector<16x128xf32>
    %13 = tpu.matmul %12, %6, %cst_15 {dimension_numbers = #tpu.dot_dimension_numbers<[1], [0], [0], [1], [0, 0, 1, 1], [], []>} : vector<16x128xbf16>, vector<128x128xbf16>, vector<16x128xf32> -> vector<16x128xf32>
    %c0_i32 = arith.constant 0 : i32
    %14 = arith.addi %2, %c0_i32 : i32
    %15 = arith.index_cast %14 : i32 to index
    %16 = memref.load %arg2[%15] : memref<40xf32, #tpu.memory_space<smem>>
    %c0_i32_16 = arith.constant 0 : i32
    %17 = arith.addi %2, %c0_i32_16 : i32
    %18 = arith.index_cast %17 : i32 to index
    %19 = memref.load %arg3[%18] : memref<40xf32, #tpu.memory_space<smem>>
    %c0_17 = arith.constant 0 : index
    %c0_18 = arith.constant 0 : index
    %c0_19 = arith.constant 0 : index
    %c0_20 = arith.constant 0 : index
    %20 = vector.load %arg4[%c0_17, %c0_18, %c0_19, %c0_20] : memref<1x5x16x128xf32, #tpu.memory_space<vmem>>, vector<1x1x16x128xf32>
    %21 = vector.shape_cast %20 : vector<1x1x16x128xf32> to vector<16x128xf32>
    %22 = vector.broadcast %19 : f32 to vector<16x128xf32>
    %23 = arith.mulf %22, %13 : vector<16x128xf32>
    %24 = vector.broadcast %16 : f32 to vector<16x128xf32>
    %25 = arith.addf %24, %23 : vector<16x128xf32>
    %26 = arith.mulf %21, %25 : vector<16x128xf32>
    %c0_21 = arith.constant 0 : index
    %c0_22 = arith.constant 0 : index
    %c0_23 = arith.constant 0 : index
    %c0_24 = arith.constant 0 : index
    %27 = vector.load %arg8[%c0_21, %c0_22, %c0_23, %c0_24] : memref<1x1x16x128xf32, #tpu.memory_space<vmem>>, vector<1x1x16x128xf32>
    %28 = vector.shape_cast %27 : vector<1x1x16x128xf32> to vector<16x128xf32>
    %29 = vector.shape_cast %26 : vector<16x128xf32> to vector<1x1x16x128xf32>
    tpu.vector_store %arg8[%c0_21, %c0_22, %c0_23, %c0_24], %29 {strides = array<i32>} : memref<1x1x16x128xf32, #tpu.memory_space<vmem>>, vector<1x1x16x128xf32>,
    %c0_25 = arith.constant 0 : index
    %c128 = arith.constant 128 : index
    %30 = vector.load %arg9[%c0_25, %c128] : memref<16x640xbf16, #tpu.memory_space<vmem>>, vector<16x128xbf16>
    %cst_26 = arith.constant dense<0.000000e+00> : vector<16x128xf32>
    %31 = tpu.matmul %30, %6, %cst_26 {dimension_numbers = #tpu.dot_dimension_numbers<[1], [0], [0], [1], [0, 0, 1, 1], [], []>} : vector<16x128xbf16>, vector<128x128xbf16>, vector<16x128xf32> -> vector<16x128xf32>
    %c1_i32 = arith.constant 1 : i32
    %32 = arith.addi %2, %c1_i32 : i32
    %33 = arith.index_cast %32 : i32 to index
    %34 = memref.load %arg2[%33] : memref<40xf32, #tpu.memory_space<smem>>
    %c1_i32_27 = arith.constant 1 : i32
    %35 = arith.addi %2, %c1_i32_27 : i32
    %36 = arith.index_cast %35 : i32 to index
    %37 = memref.load %arg3[%36] : memref<40xf32, #tpu.memory_space<smem>>
    %c0_28 = arith.constant 0 : index
    %c1 = arith.constant 1 : index
    %c0_29 = arith.constant 0 : index
    %c0_30 = arith.constant 0 : index
    %38 = vector.load %arg4[%c0_28, %c1, %c0_29, %c0_30] : memref<1x5x16x128xf32, #tpu.memory_space<vmem>>, vector<1x1x16x128xf32>
    %39 = vector.shape_cast %38 : vector<1x1x16x128xf32> to vector<16x128xf32>
    %40 = vector.broadcast %37 : f32 to vector<16x128xf32>
    %41 = arith.mulf %40, %31 : vector<16x128xf32>
    %42 = vector.broadcast %34 : f32 to vector<16x128xf32>
    %43 = arith.addf %42, %41 : vector<16x128xf32>
    %44 = arith.mulf %39, %43 : vector<16x128xf32>
    %c0_31 = arith.constant 0 : index
    %c0_32 = arith.constant 0 : index
    %c0_33 = arith.constant 0 : index
    %c0_34 = arith.constant 0 : index
    %45 = vector.load %arg8[%c0_31, %c0_32, %c0_33, %c0_34] : memref<1x1x16x128xf32, #tpu.memory_space<vmem>>, vector<1x1x16x128xf32>
    %46 = vector.shape_cast %45 : vector<1x1x16x128xf32> to vector<16x128xf32>
    %47 = arith.addf %46, %44 : vector<16x128xf32>
    %c0_35 = arith.constant 0 : index
    %c0_36 = arith.constant 0 : index
    %c0_37 = arith.constant 0 : index
    %c0_38 = arith.constant 0 : index
    %48 = vector.load %arg8[%c0_35, %c0_36, %c0_37, %c0_38] : memref<1x1x16x128xf32, #tpu.memory_space<vmem>>, vector<1x1x16x128xf32>
    %49 = vector.shape_cast %48 : vector<1x1x16x128xf32> to vector<16x128xf32>
    %50 = vector.shape_cast %47 : vector<16x128xf32> to vector<1x1x16x128xf32>
    tpu.vector_store %arg8[%c0_35, %c0_36, %c0_37, %c0_38], %50 {strides = array<i32>} : memref<1x1x16x128xf32, #tpu.memory_space<vmem>>, vector<1x1x16x128xf32>,
    %c0_39 = arith.constant 0 : index
    %c256 = arith.constant 256 : index
    %51 = vector.load %arg9[%c0_39, %c256] : memref<16x640xbf16, #tpu.memory_space<vmem>>, vector<16x128xbf16>
    %cst_40 = arith.constant dense<0.000000e+00> : vector<16x128xf32>
    %52 = tpu.matmul %51, %6, %cst_40 {dimension_numbers = #tpu.dot_dimension_numbers<[1], [0], [0], [1], [0, 0, 1, 1], [], []>} : vector<16x128xbf16>, vector<128x128xbf16>, vector<16x128xf32> -> vector<16x128xf32>
    %c2_i32 = arith.constant 2 : i32
    %53 = arith.addi %2, %c2_i32 : i32
    %54 = arith.index_cast %53 : i32 to index
    %55 = memref.load %arg2[%54] : memref<40xf32, #tpu.memory_space<smem>>
    %c2_i32_41 = arith.constant 2 : i32
    %56 = arith.addi %2, %c2_i32_41 : i32
    %57 = arith.index_cast %56 : i32 to index
    %58 = memref.load %arg3[%57] : memref<40xf32, #tpu.memory_space<smem>>
    %c0_42 = arith.constant 0 : index
    %c2 = arith.constant 2 : index
    %c0_43 = arith.constant 0 : index
    %c0_44 = arith.constant 0 : index
    %59 = vector.load %arg4[%c0_42, %c2, %c0_43, %c0_44] : memref<1x5x16x128xf32, #tpu.memory_space<vmem>>, vector<1x1x16x128xf32>
    %60 = vector.shape_cast %59 : vector<1x1x16x128xf32> to vector<16x128xf32>
    %61 = vector.broadcast %58 : f32 to vector<16x128xf32>
    %62 = arith.mulf %61, %52 : vector<16x128xf32>
    %63 = vector.broadcast %55 : f32 to vector<16x128xf32>
    %64 = arith.addf %63, %62 : vector<16x128xf32>
    %65 = arith.mulf %60, %64 : vector<16x128xf32>
    %c0_45 = arith.constant 0 : index
    %c0_46 = arith.constant 0 : index
    %c0_47 = arith.constant 0 : index
    %c0_48 = arith.constant 0 : index
    %66 = vector.load %arg8[%c0_45, %c0_46, %c0_47, %c0_48] : memref<1x1x16x128xf32, #tpu.memory_space<vmem>>, vector<1x1x16x128xf32>
    %67 = vector.shape_cast %66 : vector<1x1x16x128xf32> to vector<16x128xf32>
    %68 = arith.addf %67, %65 : vector<16x128xf32>
    %c0_49 = arith.constant 0 : index
    %c0_50 = arith.constant 0 : index
    %c0_51 = arith.constant 0 : index
    %c0_52 = arith.constant 0 : index
    %69 = vector.load %arg8[%c0_49, %c0_50, %c0_51, %c0_52] : memref<1x1x16x128xf32, #tpu.memory_space<vmem>>, vector<1x1x16x128xf32>
    %70 = vector.shape_cast %69 : vector<1x1x16x128xf32> to vector<16x128xf32>
    %71 = vector.shape_cast %68 : vector<16x128xf32> to vector<1x1x16x128xf32>
    tpu.vector_store %arg8[%c0_49, %c0_50, %c0_51, %c0_52], %71 {strides = array<i32>} : memref<1x1x16x128xf32, #tpu.memory_space<vmem>>, vector<1x1x16x128xf32>,
    %c0_53 = arith.constant 0 : index
    %c384 = arith.constant 384 : index
    %72 = vector.load %arg9[%c0_53, %c384] : memref<16x640xbf16, #tpu.memory_space<vmem>>, vector<16x128xbf16>
    %cst_54 = arith.constant dense<0.000000e+00> : vector<16x128xf32>
    %73 = tpu.matmul %72, %6, %cst_54 {dimension_numbers = #tpu.dot_dimension_numbers<[1], [0], [0], [1], [0, 0, 1, 1], [], []>} : vector<16x128xbf16>, vector<128x128xbf16>, vector<16x128xf32> -> vector<16x128xf32>
    %c3_i32 = arith.constant 3 : i32
    %74 = arith.addi %2, %c3_i32 : i32
    %75 = arith.index_cast %74 : i32 to index
    %76 = memref.load %arg2[%75] : memref<40xf32, #tpu.memory_space<smem>>
    %c3_i32_55 = arith.constant 3 : i32
    %77 = arith.addi %2, %c3_i32_55 : i32
    %78 = arith.index_cast %77 : i32 to index
    %79 = memref.load %arg3[%78] : memref<40xf32, #tpu.memory_space<smem>>
    %c0_56 = arith.constant 0 : index
    %c3 = arith.constant 3 : index
    %c0_57 = arith.constant 0 : index
    %c0_58 = arith.constant 0 : index
    %80 = vector.load %arg4[%c0_56, %c3, %c0_57, %c0_58] : memref<1x5x16x128xf32, #tpu.memory_space<vmem>>, vector<1x1x16x128xf32>
    %81 = vector.shape_cast %80 : vector<1x1x16x128xf32> to vector<16x128xf32>
    %82 = vector.broadcast %79 : f32 to vector<16x128xf32>
    %83 = arith.mulf %82, %73 : vector<16x128xf32>
    %84 = vector.broadcast %76 : f32 to vector<16x128xf32>
    %85 = arith.addf %84, %83 : vector<16x128xf32>
    %86 = arith.mulf %81, %85 : vector<16x128xf32>
    %c0_59 = arith.constant 0 : index
    %c0_60 = arith.constant 0 : index
    %c0_61 = arith.constant 0 : index
    %c0_62 = arith.constant 0 : index
    %87 = vector.load %arg8[%c0_59, %c0_60, %c0_61, %c0_62] : memref<1x1x16x128xf32, #tpu.memory_space<vmem>>, vector<1x1x16x128xf32>
    %88 = vector.shape_cast %87 : vector<1x1x16x128xf32> to vector<16x128xf32>
    %89 = arith.addf %88, %86 : vector<16x128xf32>
    %c0_63 = arith.constant 0 : index
    %c0_64 = arith.constant 0 : index
    %c0_65 = arith.constant 0 : index
    %c0_66 = arith.constant 0 : index
    %90 = vector.load %arg8[%c0_63, %c0_64, %c0_65, %c0_66] : memref<1x1x16x128xf32, #tpu.memory_space<vmem>>, vector<1x1x16x128xf32>
    %91 = vector.shape_cast %90 : vector<1x1x16x128xf32> to vector<16x128xf32>
    %92 = vector.shape_cast %89 : vector<16x128xf32> to vector<1x1x16x128xf32>
    tpu.vector_store %arg8[%c0_63, %c0_64, %c0_65, %c0_66], %92 {strides = array<i32>} : memref<1x1x16x128xf32, #tpu.memory_space<vmem>>, vector<1x1x16x128xf32>,
    %c0_67 = arith.constant 0 : index
    %c512 = arith.constant 512 : index
    %93 = vector.load %arg9[%c0_67, %c512] : memref<16x640xbf16, #tpu.memory_space<vmem>>, vector<16x128xbf16>
    %cst_68 = arith.constant dense<0.000000e+00> : vector<16x128xf32>
    %94 = tpu.matmul %93, %6, %cst_68 {dimension_numbers = #tpu.dot_dimension_numbers<[1], [0], [0], [1], [0, 0, 1, 1], [], []>} : vector<16x128xbf16>, vector<128x128xbf16>, vector<16x128xf32> -> vector<16x128xf32>
    %c4_i32_69 = arith.constant 4 : i32
    %95 = arith.addi %2, %c4_i32_69 : i32
    %96 = arith.index_cast %95 : i32 to index
    %97 = memref.load %arg2[%96] : memref<40xf32, #tpu.memory_space<smem>>
    %c4_i32_70 = arith.constant 4 : i32
    %98 = arith.addi %2, %c4_i32_70 : i32
    %99 = arith.index_cast %98 : i32 to index
    %100 = memref.load %arg3[%99] : memref<40xf32, #tpu.memory_space<smem>>
    %c0_71 = arith.constant 0 : index
    %c4 = arith.constant 4 : index
    %c0_72 = arith.constant 0 : index
    %c0_73 = arith.constant 0 : index
    %101 = vector.load %arg4[%c0_71, %c4, %c0_72, %c0_73] : memref<1x5x16x128xf32, #tpu.memory_space<vmem>>, vector<1x1x16x128xf32>
    %102 = vector.shape_cast %101 : vector<1x1x16x128xf32> to vector<16x128xf32>
    %103 = vector.broadcast %100 : f32 to vector<16x128xf32>
    %104 = arith.mulf %103, %94 : vector<16x128xf32>
    %105 = vector.broadcast %97 : f32 to vector<16x128xf32>
    %106 = arith.addf %105, %104 : vector<16x128xf32>
    %107 = arith.mulf %102, %106 : vector<16x128xf32>
    %c0_74 = arith.constant 0 : index
    %c0_75 = arith.constant 0 : index
    %c0_76 = arith.constant 0 : index
    %c0_77 = arith.constant 0 : index
    %108 = vector.load %arg8[%c0_74, %c0_75, %c0_76, %c0_77] : memref<1x1x16x128xf32, #tpu.memory_space<vmem>>, vector<1x1x16x128xf32>
    %109 = vector.shape_cast %108 : vector<1x1x16x128xf32> to vector<16x128xf32>
    %110 = arith.addf %109, %107 : vector<16x128xf32>
    %c0_78 = arith.constant 0 : index
    %c0_79 = arith.constant 0 : index
    %c0_80 = arith.constant 0 : index
    %c0_81 = arith.constant 0 : index
    %111 = vector.load %arg8[%c0_78, %c0_79, %c0_80, %c0_81] : memref<1x1x16x128xf32, #tpu.memory_space<vmem>>, vector<1x1x16x128xf32>
    %112 = vector.shape_cast %111 : vector<1x1x16x128xf32> to vector<16x128xf32>
    %113 = vector.shape_cast %110 : vector<16x128xf32> to vector<1x1x16x128xf32>
    tpu.vector_store %arg8[%c0_78, %c0_79, %c0_80, %c0_81], %113 {strides = array<i32>} : memref<1x1x16x128xf32, #tpu.memory_space<vmem>>, vector<1x1x16x128xf32>,
    return
  }
  func.func @transform_0(%arg0: i32, %arg1: i32, %arg2: memref<40xf32, #tpu.memory_space<smem>>, %arg3: memref<40xf32, #tpu.memory_space<smem>>) -> (i32, i32, i32, i32) {
    %c0_i32 = arith.constant 0 : i32
    %c0_i32_0 = arith.constant 0 : i32
    %c0_i32_1 = arith.constant 0 : i32
    %c0_i32_2 = arith.constant 0 : i32
    return %arg0, %c0_i32, %c0_i32_0, %c0_i32_1 : i32, i32, i32, i32
  }
  func.func @transform_1(%arg0: i32, %arg1: i32, %arg2: memref<40xf32, #tpu.memory_space<smem>>, %arg3: memref<40xf32, #tpu.memory_space<smem>>) -> (i32, i32, i32, i32) {
    %c0_i32 = arith.constant 0 : i32
    %c0_i32_0 = arith.constant 0 : i32
    %c0_i32_1 = arith.constant 0 : i32
    return %arg0, %arg1, %c0_i32, %c0_i32_0 : i32, i32, i32, i32
  }
  func.func @transform_2(%arg0: i32, %arg1: i32, %arg2: memref<40xf32, #tpu.memory_space<smem>>, %arg3: memref<40xf32, #tpu.memory_space<smem>>) -> (i32, i32, i32, i32) {
    %c0_i32 = arith.constant 0 : i32
    %c0_i32_0 = arith.constant 0 : i32
    %c0_i32_1 = arith.constant 0 : i32
    return %arg0, %arg1, %c0_i32, %c0_i32_0 : i32, i32, i32, i32
  }
  func.func @transform_3(%arg0: i32, %arg1: i32, %arg2: memref<40xf32, #tpu.memory_space<smem>>, %arg3: memref<40xf32, #tpu.memory_space<smem>>) -> (i32, i32, i32, i32) {
    %c0_i32 = arith.constant 0 : i32
    %c0_i32_0 = arith.constant 0 : i32
    %c0_i32_1 = arith.constant 0 : i32
    return %arg0, %arg1, %c0_i32, %c0_i32_0 : i32, i32, i32, i32
  }
  func.func @transform_4(%arg0: i32, %arg1: i32, %arg2: memref<40xf32, #tpu.memory_space<smem>>, %arg3: memref<40xf32, #tpu.memory_space<smem>>) -> (i32, i32, i32, i32) {
    %c0_i32 = arith.constant 0 : i32
    %c0_i32_0 = arith.constant 0 : i32
    %c0_i32_1 = arith.constant 0 : i32
    return %arg0, %arg1, %c0_i32, %c0_i32_0 : i32, i32, i32, i32
  }
}

</mosaic_0001>

<llo_original>
// kernel: tpu_custom_call.1
$region0: #{tpu_custom_call.1}
  #allocation0 [shape = 'u32[]', space=smem, size = 0x4, offset = 0x4, fixed_abs, tag = 'smem constant byte address 0x4 - core index']
  #allocation1 [shape = 'u32[144,128]{1,0:T(1,128)}', space=vmem, size = 0x12000, scoped, tag = 'internal scratch']
  #allocation2 [shape = 'bf16[16,640]{1,0:T(8,128)(2,1)}', space=vmem, size = 0x5000, scoped, tag = 'scratch operand']
  #allocation3 [shape = 's32[1]{0}', space=sflag, size = 0x4, scoped, tag = 'scoped memory for tpu_custom_call.1']
  #allocation4 [shape = 'u8[512]{0}', space=smem, size = 0x200, scoped, tag = 'prefetched SMEM operand 0']
  #allocation5 [shape = 'u8[512]{0}', space=smem, size = 0x200, scoped, tag = 'prefetched SMEM operand 1']
  %s0 = inlined_call_operand.hbm [shape: f32[40], index: 0, kind: input, shape index: {}]
  %s1 = inlined_call_operand.vmem [shape: f32[40], index: 1, kind: input, shape index: {}]
  %s2 = inlined_call_operand.hbm [shape: f32[2,5,16,128], index: 2, kind: input, shape index: {}]
  %s3 = inlined_call_operand.hbm [shape: bf16[2,4,16,640], index: 3, kind: input, shape index: {}]
  %s4 = inlined_call_operand.hbm [shape: bf16[2,4,16,16], index: 4, kind: input, shape index: {}]
  %s5 = inlined_call_operand.hbm [shape: bf16[2,4,128,128], index: 5, kind: input, shape index: {}]
  %s6 = inlined_call_operand.hbm [shape: f32[2,4,16,128], index: 6, kind: output, shape index: {}]
  %s7 = sld [smem:[#allocation0]]
  $region65: #{tpu_custom_call.1} parent=0
    _
  %s9 = ssub.s32 1, %s7
  %s10 = scalar_select 0, %s9, %s7
  %12 = dma.hbm_to_smem %s0, 16, [#allocation4], [#allocation3]
  %s13 = sshll.u32 %s1, 4
  %s14 = int_to_ptr.vmem [resolvable:$true] %s13
  %16 = dma.vmem_to_smem %s14, 16, [#allocation5], [#allocation3]
  %17 = dma.done [#allocation3], 32
  %18 = sfence
  $region1: #{tpu_custom_call.1} parent=0
    #allocation6 [shape = 'u8[81920]{0}', space=vmem, size = 0x14000, scoped, tag = 'input window, operand 2']
    #allocation7 [shape = 's32[2]{0}', space=sflag, size = 0x8, scoped, tag = 'scoped memory for tpu_custom_call.1']
    #allocation8 [shape = 's32[2]{0}', space=sflag, size = 0x8, scoped, tag = 'scoped memory for tpu_custom_call.1']
    #allocation9 [shape = 'u8[40960]{0}', space=vmem, size = 0xa000, scoped, tag = 'input window, operand 3']
    #allocation10 [shape = 's32[2]{0}', space=sflag, size = 0x8, scoped, tag = 'scoped memory for tpu_custom_call.1']
    #allocation11 [shape = 'u8[8192]{0}', space=vmem, size = 0x2000, scoped, tag = 'input window, operand 4']
    #allocation12 [shape = 'u8[65536]{0}', space=vmem, size = 0x10000, scoped, tag = 'input window, operand 5']
    #allocation13 [shape = 's32[2]{0}', space=sflag, size = 0x8, scoped, tag = 'scoped memory for tpu_custom_call.1']
    #allocation14 [shape = 'u8[16384]{0}', space=vmem, size = 0x4000, scoped, tag = 'output window, operand 0']
    %19 = vsyncpa [#allocation7], 0
    %s20 = scalar_lea.sflag [#allocation7], 1
    %21 = vsyncpa %s20, 0
    %22 = vsyncpa [#allocation10], 0
    %s23 = scalar_lea.sflag [#allocation10], 1
    %24 = vsyncpa %s23, 0
    %25 = vsyncpa [#allocation13], 0
    %s26 = scalar_lea.sflag [#allocation13], 1
    %27 = vsyncpa %s26, 0
    %28 = vsyncpa [#allocation8], 0
    %s29 = scalar_lea.sflag [#allocation8], 1
    %30 = vsyncpa %s29, 0
    loop: start=0, step=1, limit=10
    $region2: #{tpu_custom_call.1} parent=1 // loop_pre_header
      _
    $region3: #{tpu_custom_call.1} parent=1 // loop_header
      %s32 = sphi 0, %s36
      %p33 = scmp.ge.s32.totalorder %s32, 10
      %s39 = sphi 0, %s51
      %s40 = sphi 0, %s47
      %s41 = sphi 0, %s39
      %s42 = sphi 0, %s40
      %s43 = sphi 0, %s41
      %s44 = sphi 0, %s42
      %s54 = sphi 0, %s56
      %s57 = sphi 0, %s54
      %s58 = sphi 0, %s57
      %s74 = sphi 0, %s58
      %s82 = sphi 0, %s84
      %s85 = sphi 0, %s82
      %s86 = sphi 0, %s85
      %s102 = sphi 0, %s86
      %s110 = sphi 0, %s112
      %s113 = sphi 0, %s110
      %s114 = sphi 0, %s113
      %s130 = sphi 0, %s114
      %s138 = sphi 0, %s140
      %s141 = sphi 0, %s138
      %s142 = sphi 0, %s141
      %s158 = sphi 0, %s142
      %s166 = sphi 0, %s168
      %s169 = sphi 0, %s166
      %s170 = sphi 0, %s169
      %s186 = sphi 0, %s170
    $region4: #{tpu_custom_call.1} parent=1 // loop_header_branch
      %35 = sbr.rel (%p33) target = $region8
    $region5: #{tpu_custom_call.1} parent=1 // loop_body
      %s37 = ssub.s32 %s32, 1
      %s38 = ssub.s32 %s32, 2
      %s45 = sadd.s32 1, %s40
      %p46 = scmp.ge.s32.totalorder %s45, 4
      %s47 = scalar_select %p46, 0, %s45
      %s48 = sadd.s32 1, %s39
      %s49 = scalar_select %p46, %s48, %s39
      %p50 = scmp.ge.s32.totalorder %s49, 2
      %s51 = scalar_select %p50, 0, %s49
      %s52 = ssub.s32 %s39, %s51
      %p53 = scmp.eq.s32.totalorder %s52, 0
      %s55 = sadd.s32 %s54, 1
      %s56 = scalar_select %p53, %s54, %s55
      %p59 = pneg %p53
      %p60 = scmp.eq.s32.totalorder %s32, 7
      %p61 = por %p59, %p60
      %p62 = scmp.ne.s32.totalorder %s54, %s57
      %p63 = scmp.eq.s32.totalorder %s32, 0
      %p64 = por %p62, %p63
      %p65 = scmp.ne.s32.totalorder %s54, %s57
      %p66 = scmp.eq.s32.totalorder %s37, 7
      %p67 = por %p65, %p66
      %p68 = scmp.ne.s32.totalorder %s57, %s58
      %p69 = scmp.eq.s32.totalorder %s37, 0
      %p70 = por %p68, %p69
      %p71 = scmp.ne.s32.totalorder %s57, %s58
      %p72 = scmp.eq.s32.totalorder %s38, 7
      %p73 = por %p71, %p72
      %p75 = scmp.ne.s32.totalorder %s58, %s74
      %p76 = scmp.eq.s32.totalorder %s38, 0
      %p77 = por %p75, %p76
      %s78 = ssub.s32 %s39, %s51
      %s79 = ssub.s32 %s40, %s47
      %s80 = sor.u32 %s78, %s79
      %p81 = scmp.eq.s32.totalorder %s80, 0
      %s83 = sadd.s32 %s82, 1
      %s84 = scalar_select %p81, %s82, %s83
      %p87 = pneg %p81
      %p88 = scmp.eq.s32.totalorder %s32, 7
      %p89 = por %p87, %p88
      %p90 = scmp.ne.s32.totalorder %s82, %s85
      %p91 = scmp.eq.s32.totalorder %s32, 0
      %p92 = por %p90, %p91
      %p93 = scmp.ne.s32.totalorder %s82, %s85
      %p94 = scmp.eq.s32.totalorder %s37, 7
      %p95 = por %p93, %p94
      %p96 = scmp.ne.s32.totalorder %s85, %s86
      %p97 = scmp.eq.s32.totalorder %s37, 0
      %p98 = por %p96, %p97
      %p99 = scmp.ne.s32.totalorder %s85, %s86
      %p100 = scmp.eq.s32.totalorder %s38, 7
      %p101 = por %p99, %p100
      %p103 = scmp.ne.s32.totalorder %s86, %s102
      %p104 = scmp.eq.s32.totalorder %s38, 0
      %p105 = por %p103, %p104
      %s106 = ssub.s32 %s39, %s51
      %s107 = ssub.s32 %s40, %s47
      %s108 = sor.u32 %s106, %s107
      %p109 = scmp.eq.s32.totalorder %s108, 0
      %s111 = sadd.s32 %s110, 1
      %s112 = scalar_select %p109, %s110, %s111
      %p115 = pneg %p109
      %p116 = scmp.eq.s32.totalorder %s32, 7
      %p117 = por %p115, %p116
      %p118 = scmp.ne.s32.totalorder %s110, %s113
      %p119 = scmp.eq.s32.totalorder %s32, 0
      %p120 = por %p118, %p119
      %p121 = scmp.ne.s32.totalorder %s110, %s113
      %p122 = scmp.eq.s32.totalorder %s37, 7
      %p123 = por %p121, %p122
      %p124 = scmp.ne.s32.totalorder %s113, %s114
      %p125 = scmp.eq.s32.totalorder %s37, 0
      %p126 = por %p124, %p125
      %p127 = scmp.ne.s32.totalorder %s113, %s114
      %p128 = scmp.eq.s32.totalorder %s38, 7
      %p129 = por %p127, %p128
      %p131 = scmp.ne.s32.totalorder %s114, %s130
      %p132 = scmp.eq.s32.totalorder %s38, 0
      %p133 = por %p131, %p132
      %s134 = ssub.s32 %s39, %s51
      %s135 = ssub.s32 %s40, %s47
      %s136 = sor.u32 %s134, %s135
      %p137 = scmp.eq.s32.totalorder %s136, 0
      %s139 = sadd.s32 %s138, 1
      %s140 = scalar_select %p137, %s138, %s139
      %p143 = pneg %p137
      %p144 = scmp.eq.s32.totalorder %s32, 7
      %p145 = por %p143, %p144
      %p146 = scmp.ne.s32.totalorder %s138, %s141
      %p147 = scmp.eq.s32.totalorder %s32, 0
      %p148 = por %p146, %p147
      %p149 = scmp.ne.s32.totalorder %s138, %s141
      %p150 = scmp.eq.s32.totalorder %s37, 7
      %p151 = por %p149, %p150
      %p152 = scmp.ne.s32.totalorder %s141, %s142
      %p153 = scmp.eq.s32.totalorder %s37, 0
      %p154 = por %p152, %p153
      %p155 = scmp.ne.s32.totalorder %s141, %s142
      %p156 = scmp.eq.s32.totalorder %s38, 7
      %p157 = por %p155, %p156
      %p159 = scmp.ne.s32.totalorder %s142, %s158
      %p160 = scmp.eq.s32.totalorder %s38, 0
      %p161 = por %p159, %p160
      %s162 = ssub.s32 %s39, %s51
      %s163 = ssub.s32 %s40, %s47
      %s164 = sor.u32 %s162, %s163
      %p165 = scmp.eq.s32.totalorder %s164, 0
      %s167 = sadd.s32 %s166, 1
      %s168 = scalar_select %p165, %s166, %s167
      %p171 = pneg %p165
      %p172 = scmp.eq.s32.totalorder %s32, 7
      %p173 = por %p171, %p172
      %p174 = scmp.ne.s32.totalorder %s166, %s169
      %p175 = scmp.eq.s32.totalorder %s32, 0
      %p176 = por %p174, %p175
      %p177 = scmp.ne.s32.totalorder %s166, %s169
      %p178 = scmp.eq.s32.totalorder %s37, 7
      %p179 = por %p177, %p178
      %p180 = scmp.ne.s32.totalorder %s169, %s170
      %p181 = scmp.eq.s32.totalorder %s37, 0
      %p182 = por %p180, %p181
      %p183 = scmp.ne.s32.totalorder %s169, %s170
      %p184 = scmp.eq.s32.totalorder %s38, 7
      %p185 = por %p183, %p184
      %p187 = scmp.ne.s32.totalorder %s170, %s186
      %p188 = scmp.eq.s32.totalorder %s38, 0
      %p189 = por %p187, %p188
      %p190 = scmp.le.s32.totalorder 1, %s32
      %p191 = scmp.lt.s32.totalorder %s32, 9
      %p192 = pnand %p190, %p191
      %p193 = pneg %p192
      // Predicated region
      $region9: #{tpu_custom_call.1} parent=5 // pred_check
        _
      $region10: #{tpu_custom_call.1} parent=5 // pred_check_branch
        %195 = sbr.rel (%p192) target = $region12
      $region11: #{tpu_custom_call.1} parent=5 // pred_region
        %s196 = ssub.s32 %s32, 1
      $region12: #{tpu_custom_call.1} parent=5 // pred_fallthru
        _
      %p197 = scmp.lt.s32.totalorder %s32, 8
      // Predicated region
      $region13: #{tpu_custom_call.1} parent=5 // pred_check
        %p198 = pneg %p197
      $region14: #{tpu_custom_call.1} parent=5 // pred_check_branch
        %200 = sbr.rel (%p198) target = $region16
      $region15: #{tpu_custom_call.1} parent=5 // pred_region
        // Predicated region
        $region17: #{tpu_custom_call.1} parent=15 // pred_check
          %p201 = pneg %p64
        $region18: #{tpu_custom_call.1} parent=15 // pred_check_branch
          %203 = sbr.rel (%p201) target = $region20
        $region19: #{tpu_custom_call.1} parent=15 // pred_region
          %s204 = sand.u32 %s54, 1
          %s205 = scalar_lea.sflag [#allocation7], %s204
          %s206 = sand.u32 %s54, 1
          %s207 = smul.addr %s206, 80
          %s208 = scalar_lea.vmem [#allocation6], %s207
          %s210 = ssub.s32 1280, 1280
          %211 = vsyncadd %s205, %s210
          %s212 = smul.addr %s39, 10
          %s213 = smul.addr %s212, 128
          %s214 = scalar_lea.hbm %s2, %s213
          %s215 = sshll.u32 %s208, 4
          %s216 = int_to_ptr.vmem [resolvable:$true] %s215
          %221 = dma.hbm_to_vmem [thread:$0]  %s214, 1280, %s216, %s205, 128, 128, 8
        $region20: #{tpu_custom_call.1} parent=15 // pred_fallthru
          _
        // Predicated region
        $region21: #{tpu_custom_call.1} parent=15 // pred_check
          %p222 = pneg %p92
        $region22: #{tpu_custom_call.1} parent=15 // pred_check_branch
          %224 = sbr.rel (%p222) target = $region24
        $region23: #{tpu_custom_call.1} parent=15 // pred_region
          %s225 = sand.u32 %s32, 1
          %s226 = scalar_lea.sflag [#allocation10], %s225
          %s227 = sand.u32 %s82, 1
          %s228 = smul.addr %s227, 40
          %s229 = scalar_lea.vmem [#allocation9], %s228
          %s231 = ssub.s32 640, 640
          %232 = vsyncadd %s226, %s231
          %s233 = smul.addr %s40, 10
          %s234 = smul.addr %s39, 40
          %s235 = sadd.s32 %s233, %s234
          %s236 = smul.addr %s235, 64
          %s237 = scalar_lea.hbm %s3, %s236
          %s238 = sshll.u32 %s229, 4
          %s239 = int_to_ptr.vmem [resolvable:$true] %s238
          %244 = dma.hbm_to_vmem [thread:$0]  %s237, 640, %s239, %s226, 320, 320, 20
        $region24: #{tpu_custom_call.1} parent=15 // pred_fallthru
          _
        // Predicated region
        $region25: #{tpu_custom_call.1} parent=15 // pred_check
          %p245 = pneg %p120
        $region26: #{tpu_custom_call.1} parent=15 // pred_check_branch
          %247 = sbr.rel (%p245) target = $region28
        $region27: #{tpu_custom_call.1} parent=15 // pred_region
          %s248 = sand.u32 %s32, 1
          %s249 = scalar_lea.sflag [#allocation10], %s248
          %s250 = sand.u32 %s110, 1
          %s251 = smul.addr %s250, 8
          %s252 = scalar_lea.vmem [#allocation11], %s251
          %s254 = ssub.s32 128, 128
          %255 = vsyncadd %s249, %s254
          %s256 = smul.addr %s40, 2
          %s257 = smul.addr %s39, 8
          %s258 = sadd.s32 %s256, %s257
          %s259 = smul.addr %s258, 64
          %s260 = scalar_lea.hbm %s4, %s259
          %s261 = sshll.u32 %s252, 4
          %s262 = int_to_ptr.vmem [resolvable:$true] %s261
          %267 = dma.hbm_to_vmem [thread:$0]  %s260, 128, %s262, %s249, 64, 64, 4
        $region28: #{tpu_custom_call.1} parent=15 // pred_fallthru
          _
        // Predicated region
        $region29: #{tpu_custom_call.1} parent=15 // pred_check
          %p268 = pneg %p148
        $region30: #{tpu_custom_call.1} parent=15 // pred_check_branch
          %270 = sbr.rel (%p268) target = $region32
        $region31: #{tpu_custom_call.1} parent=15 // pred_region
          %s271 = sand.u32 %s138, 1
          %s272 = scalar_lea.sflag [#allocation13], %s271
          %s273 = sand.u32 %s138, 1
          %s274 = smul.addr %s273, 64
          %s275 = scalar_lea.vmem [#allocation12], %s274
          %s277 = ssub.s32 1024, 1024
          %278 = vsyncadd %s272, %s277
          %s279 = smul.addr %s40, 16
          %s280 = smul.addr %s39, 64
          %s281 = sadd.s32 %s279, %s280
          %s282 = smul.addr %s281, 64
          %s283 = scalar_lea.hbm %s5, %s282
          %s284 = sshll.u32 %s275, 4
          %s285 = int_to_ptr.vmem [resolvable:$true] %s284
          %290 = dma.hbm_to_vmem [thread:$0]  %s283, 1024, %s285, %s272, 64, 64, 4
        $region32: #{tpu_custom_call.1} parent=15 // pred_fallthru
          _
      $region16: #{tpu_custom_call.1} parent=5 // pred_fallthru
        _
      %p291 = scmp.le.s32.totalorder 1, %s32
      %p292 = scmp.lt.s32.totalorder %s32, 9
      %p293 = pnand %p291, %p292
      %p294 = pneg %p293
      // Predicated region
      $region33: #{tpu_custom_call.1} parent=5 // pred_check
        _
      $region34: #{tpu_custom_call.1} parent=5 // pred_check_branch
        %296 = sbr.rel (%p293) target = $region36
      $region35: #{tpu_custom_call.1} parent=5 // pred_region
        %s297 = ssub.s32 %s32, 1
        %s298 = sand.u32 %s57, 1
        %s299 = scalar_lea.sflag [#allocation7], %s298
        %s300 = sand.u32 %s57, 1
        %s301 = smul.addr %s300, 80
        %s302 = scalar_lea.vmem [#allocation6], %s301
        // Predicated region
        $region37: #{tpu_custom_call.1} parent=35 // pred_check
          %p303 = pneg %p70
        $region38: #{tpu_custom_call.1} parent=35 // pred_check_branch
          %305 = sbr.rel (%p303) target = $region40
        $region39: #{tpu_custom_call.1} parent=35 // pred_region
          %306 = dma.done %s299, 1280
        $region40: #{tpu_custom_call.1} parent=35 // pred_fallthru
          _
        %s307 = sand.u32 %s37, 1
        %s308 = scalar_lea.sflag [#allocation10], %s307
        %s309 = sand.u32 %s85, 1
        %s310 = smul.addr %s309, 40
        %s311 = scalar_lea.vmem [#allocation9], %s310
        // Predicated region
        $region41: #{tpu_custom_call.1} parent=35 // pred_check
          %p312 = pneg %p98
        $region42: #{tpu_custom_call.1} parent=35 // pred_check_branch
          %314 = sbr.rel (%p312) target = $region44
        $region43: #{tpu_custom_call.1} parent=35 // pred_region
          %315 = dma.done %s308, 640
        $region44: #{tpu_custom_call.1} parent=35 // pred_fallthru
          _
        %s316 = sand.u32 %s37, 1
        %s317 = scalar_lea.sflag [#allocation10], %s316
        %s318 = sand.u32 %s113, 1
        %s319 = smul.addr %s318, 8
        %s320 = scalar_lea.vmem [#allocation11], %s319
        // Predicated region
        $region45: #{tpu_custom_call.1} parent=35 // pred_check
          %p321 = pneg %p126
        $region46: #{tpu_custom_call.1} parent=35 // pred_check_branch
          %323 = sbr.rel (%p321) target = $region48
        $region47: #{tpu_custom_call.1} parent=35 // pred_region
          %324 = dma.done %s317, 128
        $region48: #{tpu_custom_call.1} parent=35 // pred_fallthru
          _
        %s325 = sand.u32 %s141, 1
        %s326 = scalar_lea.sflag [#allocation13], %s325
        %s327 = sand.u32 %s141, 1
        %s328 = smul.addr %s327, 64
        %s329 = scalar_lea.vmem [#allocation12], %s328
        // Predicated region
        $region49: #{tpu_custom_call.1} parent=35 // pred_check
          %p330 = pneg %p154
        $region50: #{tpu_custom_call.1} parent=35 // pred_check_branch
          %332 = sbr.rel (%p330) target = $region52
        $region51: #{tpu_custom_call.1} parent=35 // pred_region
          %333 = dma.done %s326, 1024
        $region52: #{tpu_custom_call.1} parent=35 // pred_fallthru
          _
        %s334 = sand.u32 %s57, 1
        %s335 = scalar_lea.sflag [#allocation7], %s334
        %s336 = sand.u32 %s57, 1
        %s337 = smul.addr %s336, 80
        %s338 = scalar_lea.vmem [#allocation6], %s337
        %p339 = pneg %p70
        %p340 = pneg %p67
        %s341 = sand.u32 %s37, 1
        %s342 = scalar_lea.sflag [#allocation10], %s341
        %s343 = sand.u32 %s85, 1
        %s344 = smul.addr %s343, 40
        %s345 = scalar_lea.vmem [#allocation9], %s344
        %p346 = pneg %p98
        %p347 = pneg %p95
        %s348 = sand.u32 %s37, 1
        %s349 = scalar_lea.sflag [#allocation10], %s348
        %s350 = sand.u32 %s113, 1
        %s351 = smul.addr %s350, 8
        %s352 = scalar_lea.vmem [#allocation11], %s351
        %p353 = pneg %p126
        %p354 = pneg %p123
        %s355 = sand.u32 %s141, 1
        %s356 = scalar_lea.sflag [#allocation13], %s355
        %s357 = sand.u32 %s141, 1
        %s358 = smul.addr %s357, 64
        %s359 = scalar_lea.vmem [#allocation12], %s358
        %p360 = pneg %p154
        %p361 = pneg %p151
        %p362 = pneg %p182
        %p363 = pneg %p179
        %s364 = sand.u32 %s169, 1
        %s365 = scalar_lea.sflag [#allocation8], %s364
        %s366 = sand.u32 %s169, 1
        %s367 = smul.addr %s366, 16
        %s368 = scalar_lea.vmem [#allocation14], %s367
        %s370 = smul.u32 %s41, 4
        %s371 = sadd.s32 %s370, %s42
        %s372 = smul.u32 %s371, 5
        %v373 = vld [vmem:[%s320] sm:$0xf]
        %v374 = vld [vmem:[%s320 + $0x4] sm:$0xf]
        %v375 = vld [vmem:[%s329] sm:$0xf]
        %v376 = vld [vmem:[%s329 + $0x4] sm:$0xf]
        %v377 = vld [vmem:[%s329 + $0x8] sm:$0xf]
        %v378 = vld [vmem:[%s329 + $0xc] sm:$0xf]
        %v379 = vld [vmem:[%s329 + $0x10] sm:$0xf]
        %v380 = vld [vmem:[%s329 + $0x14] sm:$0xf]
        %v381 = vld [vmem:[%s329 + $0x18] sm:$0xf]
        %v382 = vld [vmem:[%s329 + $0x1c] sm:$0xf]
        %v383 = vld [vmem:[%s329 + $0x20] sm:$0xf]
        %v384 = vld [vmem:[%s329 + $0x24] sm:$0xf]
        %v385 = vld [vmem:[%s329 + $0x28] sm:$0xf]
        %v386 = vld [vmem:[%s329 + $0x2c] sm:$0xf]
        %v387 = vld [vmem:[%s329 + $0x30] sm:$0xf]
        %v388 = vld [vmem:[%s329 + $0x34] sm:$0xf]
        %v389 = vld [vmem:[%s329 + $0x38] sm:$0xf]
        %v390 = vld [vmem:[%s329 + $0x3c] sm:$0xf]
        %v391 = vld [vmem:[%s311] sm:$0xff]
        %v392 = vld [vmem:[%s311 + $0x8] sm:$0xff]
        %v393 = vld [vmem:[%s311 + $0x10] sm:$0xf]
        %v394 = vld [vmem:[%s311 + $0x14] sm:$0xff]
        %v395 = vld [vmem:[%s311 + $0x1c] sm:$0xff]
        %v396 = vld [vmem:[%s311 + $0x24] sm:$0xf]
        %v399 = vunpack.c.l.b16 %v373
        %v400 = vunpack.c.l.b16 %v374
        %v401 = vpack.c.b16 %v400, %v399
        %v408 = vunpack.c.l.b16 %v391
        %v409 = vunpack.c.h.b16 %v391
        %v410 = vunpack.c.l.b16 %v392
        %v411 = vunpack.c.h.b16 %v392
        %v412 = vunpack.c.l.b16 %v393
        %v413 = vunpack.c.l.b16 %v394
        %v414 = vunpack.c.h.b16 %v394
        %v415 = vunpack.c.l.b16 %v395
        %v416 = vunpack.c.h.b16 %v395
        %v417 = vunpack.c.l.b16 %v396
        %v418 = vpack.c.b16 %v413, %v408
        %v419 = vpack.c.b16 %v414, %v409
        %v420 = vpack.c.b16 %v415, %v410
        %v421 = vpack.c.b16 %v416, %v411
        %v422 = vpack.c.b16 %v417, %v412
        %vm428 = vcmask 130048
        %v430 = vsel %vm428, %v401, 0
        %432 = vmatprep.subr.bf16.mxu0 0
        %433 = vmatpush1.bf16.msra.mxu0 0
        %434 = vmatprep.subr.bf16.mxu0 0
        %435 = vmatpush1.bf16.msra.mxu0 0
        %436 = vmatprep.subr.bf16.mxu0 0
        %437 = vmatpush1.bf16.msra.mxu0 0
        %438 = vmatprep.subr.bf16.mxu0 0
        %439 = vmatpush1.bf16.msra.mxu0 0
        %440 = vmatprep.subr.bf16.mxu0 0
        %441 = vmatpush1.bf16.msra.mxu0 0
        %442 = vmatprep.subr.bf16.mxu0 0
        %443 = vmatpush1.bf16.msra.mxu0 0
        %444 = vmatprep.subr.bf16.mxu0 0
        %445 = vmatpush1.bf16.msra.mxu0 0
        %446 = vmatprep.subr.bf16.mxu0 %v419
        %447 = vmatpush1.bf16.msra.mxu0 %v418
        %448 = vmatprep.subr.bf16.mxu0 0
        %449 = vmatpush2.bf16.msra.mxu0 0
        %450 = vmatprep.subr.bf16.mxu0 0
        %451 = vmatpush2.bf16.msra.mxu0 0
        %452 = vmatprep.subr.bf16.mxu0 0
        %453 = vmatpush2.bf16.msra.mxu0 0
        %454 = vmatprep.subr.bf16.mxu0 0
        %455 = vmatpush2.bf16.msra.mxu0 0
        %456 = vmatprep.subr.bf16.mxu0 0
        %457 = vmatpush2.bf16.msra.mxu0 0
        %458 = vmatprep.subr.bf16.mxu0 0
        %459 = vmatpush2.bf16.msra.mxu0 0
        %460 = vmatprep.subr.bf16.mxu0 0
        %461 = vmatpush2.bf16.msra.mxu0 0
        %462 = vmatprep.subr.bf16.mxu0 0
        %463 = vmatpush2.bf16.msra.mxu0 0
        %464 = vmatprep.mubr.bf16.mxu0 0
        %465 = vmatmul.mubr.bf16.gmra.mxu0 %v430
        %v466 = vpop.f32.mrf.mxu0
        %v467 = vadd.f32 0.0, %v466
        %v468 = vpop.f32.mrf.mxu0
        %v469 = vadd.f32 0.0, %v468
        %v470 = vpop.f32.mrf.mxu0
        %v471 = vadd.f32 0.0, %v470
        %v472 = vpop.f32.mrf.mxu0
        %v473 = vadd.f32 0.0, %v472
        %474 = vdwg.mxu0
        %475 = vmatprep.subr.bf16.mxu0 0
        %476 = vmatpush1.bf16.msra.mxu0 0
        %477 = vmatprep.subr.bf16.mxu0 0
        %478 = vmatpush1.bf16.msra.mxu0 0
        %479 = vmatprep.subr.bf16.mxu0 0
        %480 = vmatpush1.bf16.msra.mxu0 0
        %481 = vmatprep.subr.bf16.mxu0 0
        %482 = vmatpush1.bf16.msra.mxu0 0
        %483 = vmatprep.subr.bf16.mxu0 0
        %484 = vmatpush1.bf16.msra.mxu0 0
        %485 = vmatprep.subr.bf16.mxu0 0
        %486 = vmatpush1.bf16.msra.mxu0 0
        %487 = vmatprep.subr.bf16.mxu0 0
        %488 = vmatpush1.bf16.msra.mxu0 0
        %489 = vmatprep.subr.bf16.mxu0 %v421
        %490 = vmatpush1.bf16.msra.mxu0 %v420
        %491 = vmatprep.subr.bf16.mxu0 0
        %492 = vmatpush2.bf16.msra.mxu0 0
        %493 = vmatprep.subr.bf16.mxu0 0
        %494 = vmatpush2.bf16.msra.mxu0 0
        %495 = vmatprep.subr.bf16.mxu0 0
        %496 = vmatpush2.bf16.msra.mxu0 0
        %497 = vmatprep.subr.bf16.mxu0 0
        %498 = vmatpush2.bf16.msra.mxu0 0
        %499 = vmatprep.subr.bf16.mxu0 0
        %500 = vmatpush2.bf16.msra.mxu0 0
        %501 = vmatprep.subr.bf16.mxu0 0
        %502 = vmatpush2.bf16.msra.mxu0 0
        %503 = vmatprep.subr.bf16.mxu0 0
        %504 = vmatpush2.bf16.msra.mxu0 0
        %505 = vmatprep.subr.bf16.mxu0 0
        %506 = vmatpush2.bf16.msra.mxu0 0
        %507 = vmatprep.mubr.bf16.mxu0 0
        %508 = vmatmul.mubr.bf16.gmra.mxu0 %v430
        %v509 = vpop.f32.mrf.mxu0
        %v510 = vadd.f32 0.0, %v509
        %v511 = vpop.f32.mrf.mxu0
        %v512 = vadd.f32 0.0, %v511
        %v513 = vpop.f32.mrf.mxu0
        %v514 = vadd.f32 0.0, %v513
        %v515 = vpop.f32.mrf.mxu0
        %v516 = vadd.f32 0.0, %v515
        %517 = vdwg.mxu0
        %518 = vmatprep.subr.bf16.mxu0 0
        %519 = vmatpush1.bf16.msra.mxu0 0
        %520 = vmatprep.subr.bf16.mxu0 0
        %521 = vmatpush1.bf16.msra.mxu0 0
        %522 = vmatprep.subr.bf16.mxu0 0
        %523 = vmatpush1.bf16.msra.mxu0 0
        %524 = vmatprep.subr.bf16.mxu0 0
        %525 = vmatpush1.bf16.msra.mxu0 0
        %526 = vmatprep.subr.bf16.mxu0 0
        %527 = vmatpush1.bf16.msra.mxu0 0
        %528 = vmatprep.subr.bf16.mxu0 0
        %529 = vmatpush1.bf16.msra.mxu0 0
        %530 = vmatprep.subr.bf16.mxu0 0
        %531 = vmatpush1.bf16.msra.mxu0 0
        %532 = vmatprep.subr.bf16.mxu0 0
        %533 = vmatpush1.bf16.msra.mxu0 %v422
        %534 = vmatprep.subr.bf16.mxu0 0
        %535 = vmatpush2.bf16.msra.mxu0 0
        %536 = vmatprep.subr.bf16.mxu0 0
        %537 = vmatpush2.bf16.msra.mxu0 0
        %538 = vmatprep.subr.bf16.mxu0 0
        %539 = vmatpush2.bf16.msra.mxu0 0
        %540 = vmatprep.subr.bf16.mxu0 0
        %541 = vmatpush2.bf16.msra.mxu0 0
        %542 = vmatprep.subr.bf16.mxu0 0
        %543 = vmatpush2.bf16.msra.mxu0 0
        %544 = vmatprep.subr.bf16.mxu0 0
        %545 = vmatpush2.bf16.msra.mxu0 0
        %546 = vmatprep.subr.bf16.mxu0 0
        %547 = vmatpush2.bf16.msra.mxu0 0
        %548 = vmatprep.subr.bf16.mxu0 0
        %549 = vmatpush2.bf16.msra.mxu0 0
        %550 = vmatprep.mubr.bf16.mxu0 0
        %551 = vmatmul.mubr.bf16.gmra.mxu0 %v430
        %v552 = vpop.f32.mrf.mxu0
        %v553 = vadd.f32 0.0, %v552
        %v554 = vpop.f32.mrf.mxu0
        %v555 = vpop.f32.mrf.mxu0
        %v556 = vadd.f32 0.0, %v555
        %v557 = vpop.f32.mrf.mxu0
        %558 = vdwg.mxu0
        %v559 = vpack.c.bf16 %v471, %v467
        %v560 = vpack.c.bf16 %v473, %v469
        %v561 = vpack.c.bf16 %v514, %v510
        %v562 = vpack.c.bf16 %v516, %v512
        %v563 = vpack.c.bf16 %v556, %v553
        %v569 = vunpack.c.l.b16 %v559
        %v570 = vunpack.c.l.b16 %v560
        %v571 = vunpack.c.l.b16 %v561
        %v572 = vunpack.c.l.b16 %v562
        %v573 = vunpack.c.l.b16 %v563
        %v574 = vunpack.c.h.b16 %v559
        %v575 = vunpack.c.h.b16 %v560
        %v576 = vunpack.c.h.b16 %v561
        %v577 = vunpack.c.h.b16 %v562
        %v578 = vunpack.c.h.b16 %v563
        %v579 = vpack.c.b16 %v570, %v569
        %v580 = vpack.c.b16 %v572, %v571
        %v581 = vpack.c.b16 %v573, %v573
        %v582 = vpack.c.b16 %v575, %v574
        %v583 = vpack.c.b16 %v577, %v576
        %v584 = vpack.c.b16 %v578, %v578
        %591 = vst [vmem:[#allocation2] sm:$0xff] %v579
        %592 = vst [vmem:[#allocation2 + $0x8] sm:$0xff] %v580
        %593 = vst [vmem:[#allocation2 + $0x10] sm:$0xf] %v581
        %594 = vst [vmem:[#allocation2 + $0x14] sm:$0xff] %v582
        %595 = vst [vmem:[#allocation2 + $0x1c] sm:$0xff] %v583
        %596 = vst [vmem:[#allocation2 + $0x24] sm:$0xf] %v584
        %v597 = vld [vmem:[#allocation2] sm:$0xf]
        %v598 = vld [vmem:[#allocation2 + $0x14] sm:$0xf]
        %v601 = vunpack.c.l.b16 %v597
        %v602 = vunpack.c.l.b16 %v598
        %v603 = vpack.c.b16 %v602, %v601
        %v621 = vunpack.c.l.b16 %v375
        %v622 = vunpack.c.l.b16 %v376
        %v623 = vunpack.c.l.b16 %v377
        %v624 = vunpack.c.l.b16 %v378
        %v625 = vunpack.c.l.b16 %v379
        %v626 = vunpack.c.l.b16 %v380
        %v627 = vunpack.c.l.b16 %v381
        %v628 = vunpack.c.l.b16 %v382
        %v629 = vunpack.c.l.b16 %v383
        %v630 = vunpack.c.l.b16 %v384
        %v631 = vunpack.c.l.b16 %v385
        %v632 = vunpack.c.l.b16 %v386
        %v633 = vunpack.c.l.b16 %v387
        %v634 = vunpack.c.l.b16 %v388
        %v635 = vunpack.c.l.b16 %v389
        %v636 = vunpack.c.l.b16 %v390
        %v637 = vpack.c.b16 %v622, %v621
        %v638 = vpack.c.b16 %v624, %v623
        %v639 = vpack.c.b16 %v626, %v625
        %v640 = vpack.c.b16 %v628, %v627
        %v641 = vpack.c.b16 %v630, %v629
        %v642 = vpack.c.b16 %v632, %v631
        %v643 = vpack.c.b16 %v634, %v633
        %v644 = vpack.c.b16 %v636, %v635
        %653 = vmatprep.subr.bf16.mxu0 0
        %654 = vmatpush1.bf16.msra.mxu0 %v644
        %655 = vmatprep.subr.bf16.mxu0 0
        %656 = vmatpush1.bf16.msra.mxu0 %v643
        %657 = vmatprep.subr.bf16.mxu0 0
        %658 = vmatpush1.bf16.msra.mxu0 %v642
        %659 = vmatprep.subr.bf16.mxu0 0
        %660 = vmatpush1.bf16.msra.mxu0 %v641
        %661 = vmatprep.subr.bf16.mxu0 0
        %662 = vmatpush1.bf16.msra.mxu0 %v640
        %663 = vmatprep.subr.bf16.mxu0 0
        %664 = vmatpush1.bf16.msra.mxu0 %v639
        %665 = vmatprep.subr.bf16.mxu0 0
        %666 = vmatpush1.bf16.msra.mxu0 %v638
        %667 = vmatprep.subr.bf16.mxu0 0
        %668 = vmatpush1.bf16.msra.mxu0 %v637
        %669 = vmatprep.subr.bf16.mxu0 0
        %670 = vmatpush2.bf16.msra.mxu0 0
        %671 = vmatprep.subr.bf16.mxu0 0
        %672 = vmatpush2.bf16.msra.mxu0 0
        %673 = vmatprep.subr.bf16.mxu0 0
        %674 = vmatpush2.bf16.msra.mxu0 0
        %675 = vmatprep.subr.bf16.mxu0 0
        %676 = vmatpush2.bf16.msra.mxu0 0
        %677 = vmatprep.subr.bf16.mxu0 0
        %678 = vmatpush2.bf16.msra.mxu0 0
        %679 = vmatprep.subr.bf16.mxu0 0
        %680 = vmatpush2.bf16.msra.mxu0 0
        %681 = vmatprep.subr.bf16.mxu0 0
        %682 = vmatpush2.bf16.msra.mxu0 0
        %683 = vmatprep.subr.bf16.mxu0 0
        %684 = vmatpush2.bf16.msra.mxu0 0
        %685 = vmatprep.mubr.bf16.mxu0 0
        %686 = vmatmul.mubr.bf16.gmra.mxu0 %v603
        %v687 = vpop.f32.mrf.mxu0
        %v688 = vadd.f32 0.0, %v687
        %v689 = vpop.f32.mrf.mxu0
        %v690 = vpop.f32.mrf.mxu0
        %v691 = vadd.f32 0.0, %v690
        %v692 = vpop.f32.mrf.mxu0
        %693 = vdwg.mxu0
        %s694 = sld [smem:[#allocation4 + %s372]]
        %s695 = sld [smem:[#allocation5 + %s372]]
        %v696 = vld [vmem:[%s302] sm:$0xff]
        %v697 = vld [vmem:[%s302 + $0x8] sm:$0xff]
        %v698 = vstv %s695
        %v699 = vmul.f32 %v698, %v688
        %v700 = vmul.f32 %v698, %v691
        %v701 = vstv %s694
        %v702 = vadd.f32 %v701, %v699
        %v703 = vadd.f32 %v701, %v700
        %v704 = vmul.f32 %v696, %v702
        %v705 = vmul.f32 %v697, %v703
        %706 = vst [vmem:[%s368] sm:$0xff] %v704
        %707 = vst [vmem:[%s368 + $0x8] sm:$0xff] %v705
        %v708 = vld [vmem:[#allocation2 + $0x4] sm:$0xf]
        %v709 = vld [vmem:[#allocation2 + $0x18] sm:$0xf]
        %v712 = vunpack.c.l.b16 %v708
        %v713 = vunpack.c.l.b16 %v709
        %v714 = vpack.c.b16 %v713, %v712
        %716 = vmatprep.subr.bf16.mxu0 0
        %717 = vmatpush1.bf16.msra.mxu0 %v644
        %718 = vmatprep.subr.bf16.mxu0 0
        %719 = vmatpush1.bf16.msra.mxu0 %v643
        %720 = vmatprep.subr.bf16.mxu0 0
        %721 = vmatpush1.bf16.msra.mxu0 %v642
        %722 = vmatprep.subr.bf16.mxu0 0
        %723 = vmatpush1.bf16.msra.mxu0 %v641
        %724 = vmatprep.subr.bf16.mxu0 0
        %725 = vmatpush1.bf16.msra.mxu0 %v640
        %726 = vmatprep.subr.bf16.mxu0 0
        %727 = vmatpush1.bf16.msra.mxu0 %v639
        %728 = vmatprep.subr.bf16.mxu0 0
        %729 = vmatpush1.bf16.msra.mxu0 %v638
        %730 = vmatprep.subr.bf16.mxu0 0
        %731 = vmatpush1.bf16.msra.mxu0 %v637
        %732 = vmatprep.subr.bf16.mxu0 0
        %733 = vmatpush2.bf16.msra.mxu0 0
        %734 = vmatprep.subr.bf16.mxu0 0
        %735 = vmatpush2.bf16.msra.mxu0 0
        %736 = vmatprep.subr.bf16.mxu0 0
        %737 = vmatpush2.bf16.msra.mxu0 0
        %738 = vmatprep.subr.bf16.mxu0 0
        %739 = vmatpush2.bf16.msra.mxu0 0
        %740 = vmatprep.subr.bf16.mxu0 0
        %741 = vmatpush2.bf16.msra.mxu0 0
        %742 = vmatprep.subr.bf16.mxu0 0
        %743 = vmatpush2.bf16.msra.mxu0 0
        %744 = vmatprep.subr.bf16.mxu0 0
        %745 = vmatpush2.bf16.msra.mxu0 0
        %746 = vmatprep.subr.bf16.mxu0 0
        %747 = vmatpush2.bf16.msra.mxu0 0
        %748 = vmatprep.mubr.bf16.mxu0 0
        %749 = vmatmul.mubr.bf16.gmra.mxu0 %v714
        %v750 = vpop.f32.mrf.mxu0
        %v751 = vadd.f32 0.0, %v750
        %v752 = vpop.f32.mrf.mxu0
        %v753 = vpop.f32.mrf.mxu0
        %v754 = vadd.f32 0.0, %v753
        %v755 = vpop.f32.mrf.mxu0
        %756 = vdwg.mxu0
        %s757 = sadd.s32 %s372, 1
        %s758 = sld [smem:[#allocation4 + %s757]]
        %s759 = sld [smem:[#allocation5 + %s757]]
        %s760 = scalar_lea.vmem %s302, 16 [#allocation6]
        %v761 = vld [vmem:[%s760] sm:$0xff]
        %v762 = vld [vmem:[%s760 + $0x8] sm:$0xff]
        %v763 = vstv %s759
        %v764 = vmul.f32 %v763, %v751
        %v765 = vmul.f32 %v763, %v754
        %v766 = vstv %s758
        %v767 = vadd.f32 %v766, %v764
        %v768 = vadd.f32 %v766, %v765
        %v769 = vmul.f32 %v761, %v767
        %v770 = vmul.f32 %v762, %v768
        %v771 = vld [vmem:[%s368] sm:$0xff]
        %v772 = vld [vmem:[%s368 + $0x8] sm:$0xff]
        %v773 = vadd.f32 %v771, %v769
        %v774 = vadd.f32 %v772, %v770
        %775 = vst [vmem:[%s368] sm:$0xff] %v773
        %776 = vst [vmem:[%s368 + $0x8] sm:$0xff] %v774
        %v777 = vld [vmem:[#allocation2 + $0x8] sm:$0xf]
        %v778 = vld [vmem:[#allocation2 + $0x1c] sm:$0xf]
        %v781 = vunpack.c.l.b16 %v777
        %v782 = vunpack.c.l.b16 %v778
        %v783 = vpack.c.b16 %v782, %v781
        %785 = vmatprep.subr.bf16.mxu0 0
        %786 = vmatpush1.bf16.msra.mxu0 %v644
        %787 = vmatprep.subr.bf16.mxu0 0
        %788 = vmatpush1.bf16.msra.mxu0 %v643
        %789 = vmatprep.subr.bf16.mxu0 0
        %790 = vmatpush1.bf16.msra.mxu0 %v642
        %791 = vmatprep.subr.bf16.mxu0 0
        %792 = vmatpush1.bf16.msra.mxu0 %v641
        %793 = vmatprep.subr.bf16.mxu0 0
        %794 = vmatpush1.bf16.msra.mxu0 %v640
        %795 = vmatprep.subr.bf16.mxu0 0
        %796 = vmatpush1.bf16.msra.mxu0 %v639
        %797 = vmatprep.subr.bf16.mxu0 0
        %798 = vmatpush1.bf16.msra.mxu0 %v638
        %799 = vmatprep.subr.bf16.mxu0 0
        %800 = vmatpush1.bf16.msra.mxu0 %v637
        %801 = vmatprep.subr.bf16.mxu0 0
        %802 = vmatpush2.bf16.msra.mxu0 0
        %803 = vmatprep.subr.bf16.mxu0 0
        %804 = vmatpush2.bf16.msra.mxu0 0
        %805 = vmatprep.subr.bf16.mxu0 0
        %806 = vmatpush2.bf16.msra.mxu0 0
        %807 = vmatprep.subr.bf16.mxu0 0
        %808 = vmatpush2.bf16.msra.mxu0 0
        %809 = vmatprep.subr.bf16.mxu0 0
        %810 = vmatpush2.bf16.msra.mxu0 0
        %811 = vmatprep.subr.bf16.mxu0 0
        %812 = vmatpush2.bf16.msra.mxu0 0
        %813 = vmatprep.subr.bf16.mxu0 0
        %814 = vmatpush2.bf16.msra.mxu0 0
        %815 = vmatprep.subr.bf16.mxu0 0
        %816 = vmatpush2.bf16.msra.mxu0 0
        %817 = vmatprep.mubr.bf16.mxu0 0
        %818 = vmatmul.mubr.bf16.gmra.mxu0 %v783
        %v819 = vpop.f32.mrf.mxu0
        %v820 = vadd.f32 0.0, %v819
        %v821 = vpop.f32.mrf.mxu0
        %v822 = vpop.f32.mrf.mxu0
        %v823 = vadd.f32 0.0, %v822
        %v824 = vpop.f32.mrf.mxu0
        %825 = vdwg.mxu0
        %s826 = sadd.s32 %s372, 2
        %s827 = sld [smem:[#allocation4 + %s826]]
        %s828 = sld [smem:[#allocation5 + %s826]]
        %s829 = scalar_lea.vmem %s302, 32 [#allocation6]
        %v830 = vld [vmem:[%s829] sm:$0xff]
        %v831 = vld [vmem:[%s829 + $0x8] sm:$0xff]
        %v832 = vstv %s828
        %v833 = vmul.f32 %v832, %v820
        %v834 = vmul.f32 %v832, %v823
        %v835 = vstv %s827
        %v836 = vadd.f32 %v835, %v833
        %v837 = vadd.f32 %v835, %v834
        %v838 = vmul.f32 %v830, %v836
        %v839 = vmul.f32 %v831, %v837
        %v840 = vld [vmem:[%s368] sm:$0xff]
        %v841 = vld [vmem:[%s368 + $0x8] sm:$0xff]
        %v842 = vadd.f32 %v840, %v838
        %v843 = vadd.f32 %v841, %v839
        %844 = vst [vmem:[%s368] sm:$0xff] %v842
        %845 = vst [vmem:[%s368 + $0x8] sm:$0xff] %v843
        %v846 = vld [vmem:[#allocation2 + $0xc] sm:$0xf]
        %v847 = vld [vmem:[#allocation2 + $0x20] sm:$0xf]
        %v850 = vunpack.c.l.b16 %v846
        %v851 = vunpack.c.l.b16 %v847
        %v852 = vpack.c.b16 %v851, %v850
        %854 = vmatprep.subr.bf16.mxu0 0
        %855 = vmatpush1.bf16.msra.mxu0 %v644
        %856 = vmatprep.subr.bf16.mxu0 0
        %857 = vmatpush1.bf16.msra.mxu0 %v643
        %858 = vmatprep.subr.bf16.mxu0 0
        %859 = vmatpush1.bf16.msra.mxu0 %v642
        %860 = vmatprep.subr.bf16.mxu0 0
        %861 = vmatpush1.bf16.msra.mxu0 %v641
        %862 = vmatprep.subr.bf16.mxu0 0
        %863 = vmatpush1.bf16.msra.mxu0 %v640
        %864 = vmatprep.subr.bf16.mxu0 0
        %865 = vmatpush1.bf16.msra.mxu0 %v639
        %866 = vmatprep.subr.bf16.mxu0 0
        %867 = vmatpush1.bf16.msra.mxu0 %v638
        %868 = vmatprep.subr.bf16.mxu0 0
        %869 = vmatpush1.bf16.msra.mxu0 %v637
        %870 = vmatprep.subr.bf16.mxu0 0
        %871 = vmatpush2.bf16.msra.mxu0 0
        %872 = vmatprep.subr.bf16.mxu0 0
        %873 = vmatpush2.bf16.msra.mxu0 0
        %874 = vmatprep.subr.bf16.mxu0 0
        %875 = vmatpush2.bf16.msra.mxu0 0
        %876 = vmatprep.subr.bf16.mxu0 0
        %877 = vmatpush2.bf16.msra.mxu0 0
        %878 = vmatprep.subr.bf16.mxu0 0
        %879 = vmatpush2.bf16.msra.mxu0 0
        %880 = vmatprep.subr.bf16.mxu0 0
        %881 = vmatpush2.bf16.msra.mxu0 0
        %882 = vmatprep.subr.bf16.mxu0 0
        %883 = vmatpush2.bf16.msra.mxu0 0
        %884 = vmatprep.subr.bf16.mxu0 0
        %885 = vmatpush2.bf16.msra.mxu0 0
        %886 = vmatprep.mubr.bf16.mxu0 0
        %887 = vmatmul.mubr.bf16.gmra.mxu0 %v852
        %v888 = vpop.f32.mrf.mxu0
        %v889 = vadd.f32 0.0, %v888
        %v890 = vpop.f32.mrf.mxu0
        %v891 = vpop.f32.mrf.mxu0
        %v892 = vadd.f32 0.0, %v891
        %v893 = vpop.f32.mrf.mxu0
        %894 = vdwg.mxu0
        %s895 = sadd.s32 %s372, 3
        %s896 = sld [smem:[#allocation4 + %s895]]
        %s897 = sld [smem:[#allocation5 + %s895]]
        %s898 = scalar_lea.vmem %s302, 48 [#allocation6]
        %v899 = vld [vmem:[%s898] sm:$0xff]
        %v900 = vld [vmem:[%s898 + $0x8] sm:$0xff]
        %v901 = vstv %s897
        %v902 = vmul.f32 %v901, %v889
        %v903 = vmul.f32 %v901, %v892
        %v904 = vstv %s896
        %v905 = vadd.f32 %v904, %v902
        %v906 = vadd.f32 %v904, %v903
        %v907 = vmul.f32 %v899, %v905
        %v908 = vmul.f32 %v900, %v906
        %v909 = vld [vmem:[%s368] sm:$0xff]
        %v910 = vld [vmem:[%s368 + $0x8] sm:$0xff]
        %v911 = vadd.f32 %v909, %v907
        %v912 = vadd.f32 %v910, %v908
        %913 = vst [vmem:[%s368] sm:$0xff] %v911
        %914 = vst [vmem:[%s368 + $0x8] sm:$0xff] %v912
        %v915 = vld [vmem:[#allocation2 + $0x10] sm:$0xf]
        %v916 = vld [vmem:[#allocation2 + $0x24] sm:$0xf]
        %v919 = vunpack.c.l.b16 %v915
        %v920 = vunpack.c.l.b16 %v916
        %v921 = vpack.c.b16 %v920, %v919
        %923 = vmatprep.subr.bf16.mxu0 0
        %924 = vmatpush1.bf16.msra.mxu0 %v644
        %925 = vmatprep.subr.bf16.mxu0 0
        %926 = vmatpush1.bf16.msra.mxu0 %v643
        %927 = vmatprep.subr.bf16.mxu0 0
        %928 = vmatpush1.bf16.msra.mxu0 %v642
        %929 = vmatprep.subr.bf16.mxu0 0
        %930 = vmatpush1.bf16.msra.mxu0 %v641
        %931 = vmatprep.subr.bf16.mxu0 0
        %932 = vmatpush1.bf16.msra.mxu0 %v640
        %933 = vmatprep.subr.bf16.mxu0 0
        %934 = vmatpush1.bf16.msra.mxu0 %v639
        %935 = vmatprep.subr.bf16.mxu0 0
        %936 = vmatpush1.bf16.msra.mxu0 %v638
        %937 = vmatprep.subr.bf16.mxu0 0
        %938 = vmatpush1.bf16.msra.mxu0 %v637
        %939 = vmatprep.subr.bf16.mxu0 0
        %940 = vmatpush2.bf16.msra.mxu0 0
        %941 = vmatprep.subr.bf16.mxu0 0
        %942 = vmatpush2.bf16.msra.mxu0 0
        %943 = vmatprep.subr.bf16.mxu0 0
        %944 = vmatpush2.bf16.msra.mxu0 0
        %945 = vmatprep.subr.bf16.mxu0 0
        %946 = vmatpush2.bf16.msra.mxu0 0
        %947 = vmatprep.subr.bf16.mxu0 0
        %948 = vmatpush2.bf16.msra.mxu0 0
        %949 = vmatprep.subr.bf16.mxu0 0
        %950 = vmatpush2.bf16.msra.mxu0 0
        %951 = vmatprep.subr.bf16.mxu0 0
        %952 = vmatpush2.bf16.msra.mxu0 0
        %953 = vmatprep.subr.bf16.mxu0 0
        %954 = vmatpush2.bf16.msra.mxu0 0
        %955 = vmatprep.mubr.bf16.mxu0 0
        %956 = vmatmul.mubr.bf16.gmra.mxu0 %v921
        %v957 = vpop.f32.mrf.mxu0
        %v958 = vadd.f32 0.0, %v957
        %v959 = vpop.f32.mrf.mxu0
        %v960 = vpop.f32.mrf.mxu0
        %v961 = vadd.f32 0.0, %v960
        %v962 = vpop.f32.mrf.mxu0
        %963 = vdwg.mxu0
        %s964 = sadd.s32 %s372, 4
        %s965 = sld [smem:[#allocation4 + %s964]]
        %s966 = sld [smem:[#allocation5 + %s964]]
        %s967 = scalar_lea.vmem %s302, 64 [#allocation6]
        %v968 = vld [vmem:[%s967] sm:$0xff]
        %v969 = vld [vmem:[%s967 + $0x8] sm:$0xff]
        %v970 = vstv %s966
        %v971 = vmul.f32 %v970, %v958
        %v972 = vmul.f32 %v970, %v961
        %v973 = vstv %s965
        %v974 = vadd.f32 %v973, %v971
        %v975 = vadd.f32 %v973, %v972
        %v976 = vmul.f32 %v968, %v974
        %v977 = vmul.f32 %v969, %v975
        %v978 = vld [vmem:[%s368] sm:$0xff]
        %v979 = vld [vmem:[%s368 + $0x8] sm:$0xff]
        %v980 = vadd.f32 %v978, %v976
        %v981 = vadd.f32 %v979, %v977
        %982 = vst [vmem:[%s368] sm:$0xff] %v980
        %983 = vst [vmem:[%s368 + $0x8] sm:$0xff] %v981
        %s984 = sand.u32 %s169, 1
        %s985 = scalar_lea.sflag [#allocation8], %s984
        %s986 = sand.u32 %s169, 1
        %s987 = smul.addr %s986, 16
        %s988 = scalar_lea.vmem [#allocation14], %s987
        // Predicated region
        $region53: #{tpu_custom_call.1} parent=35 // pred_check
          %p989 = pneg %p179
        $region54: #{tpu_custom_call.1} parent=35 // pred_check_branch
          %991 = sbr.rel (%p989) target = $region56
        $region55: #{tpu_custom_call.1} parent=35 // pred_region
          %s993 = ssub.s32 256, 256
          %994 = vsyncadd %s985, %s993
          %s995 = smul.addr %s42, 2
          %s996 = smul.addr %s41, 8
          %s997 = sadd.s32 %s995, %s996
          %s998 = smul.addr %s997, 128
          %s999 = scalar_lea.hbm %s6, %s998
          %s1000 = sshll.u32 %s988, 4
          %s1001 = int_to_ptr.vmem [resolvable:$true] %s1000
          %1006 = dma.vmem_to_hbm [thread:$0]  %s1001, 256, %s999, %s985, 128, 128, 8
        $region56: #{tpu_custom_call.1} parent=35 // pred_fallthru
          _
      $region36: #{tpu_custom_call.1} parent=5 // pred_fallthru
        _
      %p1007 = scmp.le.s32.totalorder 2, %s32
      // Predicated region
      $region57: #{tpu_custom_call.1} parent=5 // pred_check
        %p1008 = pneg %p1007
      $region58: #{tpu_custom_call.1} parent=5 // pred_check_branch
        %1010 = sbr.rel (%p1008) target = $region60
      $region59: #{tpu_custom_call.1} parent=5 // pred_region
        %s1011 = ssub.s32 %s32, 2
        // Predicated region
        $region61: #{tpu_custom_call.1} parent=59 // pred_check
          %p1012 = pneg %p185
        $region62: #{tpu_custom_call.1} parent=59 // pred_check_branch
          %1014 = sbr.rel (%p1012) target = $region64
        $region63: #{tpu_custom_call.1} parent=59 // pred_region
          %s1015 = sand.u32 %s170, 1
          %s1016 = scalar_lea.sflag [#allocation8], %s1015
          %s1017 = sand.u32 %s170, 1
          %s1018 = smul.addr %s1017, 16
          %s1019 = scalar_lea.vmem [#allocation14], %s1018
          %1020 = dma.done %s1016, 256
        $region64: #{tpu_custom_call.1} parent=59 // pred_fallthru
          _
      $region60: #{tpu_custom_call.1} parent=5 // pred_fallthru
        _
    $region6: #{tpu_custom_call.1} parent=1 // loop_footer
      %s36 = sadd.s32 1, %s32
    $region7: #{tpu_custom_call.1} parent=1 // loop_footer_branch
      %31 = sbr.rel target = $region3
    $region8: #{tpu_custom_call.1} parent=1 // loop_exit
      _
    %1021 = vsyncpa [#allocation7], 1
    %s1022 = scalar_lea.sflag [#allocation7], 1
    %1023 = vsyncpa %s1022, 1
    %1024 = vsyncpa [#allocation10], 1
    %s1025 = scalar_lea.sflag [#allocation10], 1
    %1026 = vsyncpa %s1025, 1
    %1027 = vsyncpa [#allocation13], 1
    %s1028 = scalar_lea.sflag [#allocation13], 1
    %1029 = vsyncpa %s1028, 1
    %1030 = vsyncpa [#allocation8], 1
    %s1031 = scalar_lea.sflag [#allocation8], 1
    %1032 = vsyncpa %s1031, 1

</llo_original>
